<compile_context>
chip_gen: v7x
topology: tpu7x:2x2x1
jax: 0.10.0
libtpu: 0.0.40
codegen_flags: <defaults>
</compile_context>

<pallas_src>
import functools

import jax
import jax.numpy as jnp
from jax import lax
from jax.experimental import pallas as pl
from jax.experimental.pallas import tpu as pltpu

_LANES = 128
_SUBLANES = 8
_GROUP = _SUBLANES * _LANES          # 1024 elements = one (8, 128) tile
_MAX_BLOCK_ROWS = 2048               # (2048, 128) f32 = 1 MiB per input per block


def _inv_diff_unscaled(o, t):
    """(1/o if valid else 0) - (1/t if valid else 0), 'valid' = not in {0, -1000}.

    Single-divide reformulation; the x1000 of the reference transform is folded
    into the final scalar (result = 1000 * sqrt(mean(d^2))).
    """
    o = o.astype(jnp.float32)
    t = t.astype(jnp.float32)
    valid_o = (o != 0.0) & (o != -1000.0)
    valid_t = (t != 0.0) & (t != -1000.0)
    o_safe = jnp.where(valid_o, o, 1.0)
    t_safe = jnp.where(valid_t, t, 1.0)
    num = jnp.where(valid_o, t_safe, 0.0) - jnp.where(valid_t, o_safe, 0.0)
    return num / (o_safe * t_safe)


def _irmse_kernel(o_ref, t_ref, out_ref, *, rows, block_rows, blocks_per_split):
    c = pl.program_id(0)   # split index (one per TensorCore on v7x)
    i = pl.program_id(1)   # reduction step within the split ("arbitrary")

    # Per-split accumulator = the VMEM-resident output block (index_map depends
    # only on c, so it stays on-chip across the whole inner reduction axis).
    @pl.when(i == 0)
    def _():
        out_ref[...] = jnp.zeros_like(out_ref)

    d = _inv_diff_unscaled(o_ref[...], t_ref[...])
    sq = d * d

    def accumulate(vals):
        # Sublane-group partial sums: pure vreg adds in the hot loop; the single
        # cross-lane reduction happens once, outside the kernel.
        out_ref[...] += jnp.sum(
            vals.reshape(block_rows // _SUBLANES, _SUBLANES, _LANES), axis=0)

    logical_block = c * blocks_per_split + i
    is_ragged = (logical_block + 1) * block_rows > rows   # ragged tail or phantom

    @pl.when(jnp.logical_not(is_ragged))
    def _():
        # Steady state: mask-free accumulate (no iota / compare / select).
        accumulate(sq)

    @pl.when(is_ragged)
    def _():
        # Only ragged/phantom blocks pay for the row masking; stale VMEM rows
        # (possibly Inf/NaN after the transform) are zeroed before accumulation.
        row_idx = logical_block * block_rows + lax.broadcasted_iota(
            jnp.int32, (block_rows, _LANES), 0)
        accumulate(jnp.where(row_idx < rows, sq, 0.0))


def _num_tensorcores_per_chip():
    # v7x has 2 TensorCores per chip; v5e/v6e have 1.  Defensive default: 1.
    try:
        kind = jax.devices()[0].device_kind.lower()
    except Exception:
        return 1
    return 2 if "v7" in kind else 1


def _partial_sums(o2d, t2d, *, max_block_rows, nsplit, core_parallel):
    rows = o2d.shape[0]                      # multiple of 8 by construction
    cap = max(_SUBLANES, (max_block_rows // _SUBLANES) * _SUBLANES)
    block_rows = min(cap, rows)
    blocks_per_split = pl.cdiv(pl.cdiv(rows, block_rows), nsplit)
    # Re-balance so the nsplit*blocks_per_split logical blocks tile `rows` as
    # tightly as possible (kills phantom blocks in the common case and balances
    # work across the two TensorCores on v7x).
    block_rows = min(
        block_rows,
        ((pl.cdiv(rows, nsplit * blocks_per_split) + _SUBLANES - 1)
         // _SUBLANES) * _SUBLANES)
    arr_blocks = pl.cdiv(rows, block_rows)

    def in_map(c, i):
        # Clamp so phantom logical blocks never DMA out of bounds; their
        # contribution is masked to zero inside the kernel.
        return (jnp.minimum(c * blocks_per_split + i, arr_blocks - 1), 0)

    kernel = functools.partial(
        _irmse_kernel, rows=rows, block_rows=block_rows,
        blocks_per_split=blocks_per_split)

    n_main = rows * _LANES
    cost = pl.CostEstimate(
        flops=16 * n_main,
        transcendentals=0,
        bytes_accessed=n_main * (o2d.dtype.itemsize + t2d.dtype.itemsize)
        + nsplit * _SUBLANES * _LANES * 4)

    if core_parallel:
        dim_sem = (pltpu.CORE_PARALLEL, "arbitrary")   # shard splits across TCs
    else:
        dim_sem = ("arbitrary", "arbitrary")

    return pl.pallas_call(
        kernel,
        out_shape=jax.ShapeDtypeStruct((nsplit * _SUBLANES, _LANES), jnp.float32),
        grid_spec=pltpu.PrefetchScalarGridSpec(
            num_scalar_prefetch=0,
            grid=(nsplit, blocks_per_split),
            in_specs=[
                pl.BlockSpec((block_rows, _LANES), in_map),
                pl.BlockSpec((block_rows, _LANES), in_map),
            ],
            out_specs=pl.BlockSpec((_SUBLANES, _LANES), lambda c, i: (c, 0)),
        ),
        compiler_params=pltpu.CompilerParams(dimension_semantics=dim_sem),
        cost_estimate=cost,
    )(o2d, t2d)


def irmse(outputs, target, *, max_block_rows=_MAX_BLOCK_ROWS):
    """iRMSE of two equally-shaped arrays (e.g. NCHW depth maps in mm)."""
    assert outputs.shape == target.shape
    n = outputs.size
    assert n > 0

    # No wrapper-side astype / jnp.pad: native dtype is streamed and upcast in
    # the kernel.  Only a <1024-element tail (if any) is handled in plain JAX,
    # so the common aligned case does zero extra HBM copies.
    flat_o = outputs.reshape(-1)
    flat_t = target.reshape(-1)

    m = (n // _GROUP) * _GROUP        # (8*128)-aligned prefix for the kernel
    rem = n - m

    tail_sum = jnp.float32(0.0)
    if rem:
        d_tail = _inv_diff_unscaled(flat_o[m:], flat_t[m:])
        tail_sum = jnp.sum(d_tail * d_tail)

    if m == 0:
        total = tail_sum
    else:
        # When rem > 0 the prefix slice still materializes once in XLA; aligned
        # inputs (the common case) incur no copy at all.
        main_o = flat_o if rem == 0 else flat_o[:m]
        main_t = flat_t if rem == 0 else flat_t[:m]
        rows = m // _LANES            # multiple of 8
        o2d = main_o.reshape(rows, _LANES)
        t2d = main_t.reshape(rows, _LANES)

        ncores = _num_tensorcores_per_chip()
        nsplit = max(1, min(ncores, rows // _SUBLANES))
        if nsplit > 1:
            try:
                partials = _partial_sums(
                    o2d, t2d, max_block_rows=max_block_rows,
                    nsplit=nsplit, core_parallel=True)
            except Exception:
                # Safe fallback: single-split sequential reduction.
                partials = _partial_sums(
                    o2d, t2d, max_block_rows=max_block_rows,
                    nsplit=1, core_parallel=False)
        else:
            partials = _partial_sums(
                o2d, t2d, max_block_rows=max_block_rows,
                nsplit=1, core_parallel=False)
        total = jnp.sum(partials) + tail_sum

    # x1000 of the reference transform folded in here; mean over the TRUE n.
    return 1000.0 * jnp.sqrt(total / jnp.float32(n))


def _irmse_ref(outputs, target):
    # Literal transcription of the PyTorch sequence, for validation.
    def tr(x):
        x = x / 1000.0
        x = jnp.where(x == 0.0, -1.0, x)
        x = 1.0 / x
        x = jnp.where(x == -1.0, 0.0, x)
        return x

    o = tr(outputs.astype(jnp.float32))
    t = tr(target.astype(jnp.float32))
    return jnp.sqrt(jnp.mean((o - t) ** 2))


def _make_inputs(shape, dtype=jnp.float32):
    key = jax.random.PRNGKey(0)
    k1, k2, k3, k4 = jax.random.split(key, 4)
    # NCHW depth-like inputs (mm); inject exact zeros so the sentinel paths
    # (x == 0 -> inverted value 0) are exercised.
    outputs = jax.random.uniform(k1, shape, jnp.float32, 100.0, 5000.0)
    target = jax.random.uniform(k2, shape, jnp.float32, 100.0, 5000.0)
    outputs = jnp.where(jax.random.uniform(k3, shape) < 0.2, 0.0, outputs)
    target = jnp.where(jax.random.uniform(k4, shape) < 0.2, 0.0, target)
    return outputs.astype(dtype), target.astype(dtype)


def _check(shape, dtype=jnp.float32, **kw):
    o, t = _make_inputs(shape, dtype)
    result = irmse(o, t, **kw)
    jax.block_until_ready(result)
    ref = _irmse_ref(o, t)
    assert jnp.allclose(result, ref, rtol=1e-5, atol=1e-6), (shape, result, ref)


if __name__ == "__main__":
    # 1) Primary small case (single block, aligned, mask-free path).
    _check((2, 4, 16, 16))
    # 2) Multi-block reduction, all blocks full (no masking at runtime).
    _check((2, 4, 16, 24), max_block_rows=8)
    # 3) Ragged tail block path (rows=24, block_rows=16 -> last block masked).
    _check((2, 4, 16, 24), max_block_rows=16)
    # 4) Kernel + plain-JAX lane tail (n = 2176 -> 2048 via kernel, 128 in tail).
    _check((2, 4, 16, 17))
    # 5) Tiny input below one (8,128) group (pure plain-JAX path, no kernel).
    _check((2, 3, 9, 13))
    # 6) Native bf16 streaming with in-kernel upcast.
    _check((2, 4, 16, 16), dtype=jnp.bfloat16)

    print("KERNEL_OK")
</pallas_src>

<mosaic_0001>
module attributes {stable_mosaic.version = 11 : i64} {
  func.func @_irmse_kernel(%arg0: i32, %arg1: i32, %arg2: memref<16x128xf32, #tpu.memory_space<vmem>>, %arg3: memref<16x128xf32, #tpu.memory_space<vmem>>, %arg4: memref<8x128xf32, #tpu.memory_space<vmem>>) attributes {dimension_semantics = [#tpu.dimension_semantics<arbitrary>, #tpu.dimension_semantics<arbitrary>], iteration_bounds = array<i64: 1, 1>, scalar_prefetch = 0 : i64, scratch_operands = 0 : i64, tpu.core_type = #tpu.core_type<tc>, window_params = [{transform_indices = @transform_0, window_bounds = array<i64: 16, 128>}, {transform_indices = @transform_1, window_bounds = array<i64: 16, 128>}, {transform_indices = @transform_2, window_bounds = array<i64: 8, 128>}]} {
    %c0_i32 = arith.constant 0 : i32
    %0 = arith.cmpi eq, %arg1, %c0_i32 : i32
    %1 = arith.extui %0 : i1 to i32
    %c0_i32_0 = arith.constant 0 : i32
    %2 = arith.cmpi ne, %1, %c0_i32_0 : i32
    scf.if %2 {
      %cst_15 = arith.constant 0.000000e+00 : f32
      %37 = vector.broadcast %cst_15 : f32 to vector<8x128xf32>
      %c0_16 = arith.constant 0 : index
      %c0_17 = arith.constant 0 : index
      %38 = vector.load %arg4[%c0_16, %c0_17] : memref<8x128xf32, #tpu.memory_space<vmem>>, vector<8x128xf32>
      tpu.vector_store %arg4[%c0_16, %c0_17], %37 {strides = array<i32>} : memref<8x128xf32, #tpu.memory_space<vmem>>, vector<8x128xf32>,
    } else {
    }
    %c0 = arith.constant 0 : index
    %c0_1 = arith.constant 0 : index
    %3 = vector.load %arg2[%c0, %c0_1] : memref<16x128xf32, #tpu.memory_space<vmem>>, vector<16x128xf32>
    %c0_2 = arith.constant 0 : index
    %c0_3 = arith.constant 0 : index
    %4 = vector.load %arg3[%c0_2, %c0_3] : memref<16x128xf32, #tpu.memory_space<vmem>>, vector<16x128xf32>
    %cst = arith.constant 0.000000e+00 : f32
    %5 = vector.broadcast %cst : f32 to vector<16x128xf32>
    %6 = arith.cmpf one, %3, %5 : vector<16x128xf32>
    %cst_4 = arith.constant -1.000000e+03 : f32
    %7 = vector.broadcast %cst_4 : f32 to vector<16x128xf32>
    %8 = arith.cmpf one, %3, %7 : vector<16x128xf32>
    %9 = arith.andi %6, %8 : vector<16x128xi1>
    %cst_5 = arith.constant 0.000000e+00 : f32
    %10 = vector.broadcast %cst_5 : f32 to vector<16x128xf32>
    %11 = arith.cmpf one, %4, %10 : vector<16x128xf32>
    %cst_6 = arith.constant -1.000000e+03 : f32
    %12 = vector.broadcast %cst_6 : f32 to vector<16x128xf32>
    %13 = arith.cmpf one, %4, %12 : vector<16x128xf32>
    %14 = arith.andi %11, %13 : vector<16x128xi1>
    %cst_7 = arith.constant 1.000000e+00 : f32
    %15 = vector.broadcast %cst_7 : f32 to vector<16x128xf32>
    %16 = arith.select %9, %3, %15 : vector<16x128xi1>, vector<16x128xf32>
    %cst_8 = arith.constant 1.000000e+00 : f32
    %17 = vector.broadcast %cst_8 : f32 to vector<16x128xf32>
    %18 = arith.select %14, %4, %17 : vector<16x128xi1>, vector<16x128xf32>
    %cst_9 = arith.constant 0.000000e+00 : f32
    %19 = vector.broadcast %cst_9 : f32 to vector<16x128xf32>
    %20 = arith.select %9, %18, %19 : vector<16x128xi1>, vector<16x128xf32>
    %cst_10 = arith.constant 0.000000e+00 : f32
    %21 = vector.broadcast %cst_10 : f32 to vector<16x128xf32>
    %22 = arith.select %14, %16, %21 : vector<16x128xi1>, vector<16x128xf32>
    %23 = arith.subf %20, %22 : vector<16x128xf32>
    %24 = arith.mulf %16, %18 : vector<16x128xf32>
    %25 = arith.divf %23, %24 : vector<16x128xf32>
    %26 = arith.mulf %25, %25 : vector<16x128xf32>
    %c1_i32 = arith.constant 1 : i32
    %27 = arith.muli %arg0, %c1_i32 : i32
    %28 = arith.addi %27, %arg1 : i32
    %c1_i32_11 = arith.constant 1 : i32
    %29 = arith.addi %28, %c1_i32_11 : i32
    %c16_i32 = arith.constant 16 : i32
    %30 = arith.muli %29, %c16_i32 : i32
    %c16_i32_12 = arith.constant 16 : i32
    %31 = arith.cmpi sgt, %30, %c16_i32_12 : i32
    %true = arith.constant true
    %32 = arith.xori %31, %true : i1
    %33 = arith.extui %32 : i1 to i32
    %c0_i32_13 = arith.constant 0 : i32
    %34 = arith.cmpi ne, %33, %c0_i32_13 : i32
    scf.if %34 {
      %c0_15 = arith.constant 0 : index
      %c0_16 = arith.constant 0 : index
      %37 = vector.load %arg4[%c0_15, %c0_16] : memref<8x128xf32, #tpu.memory_space<vmem>>, vector<8x128xf32>
      %38 = vector.shape_cast %26 : vector<16x128xf32> to vector<2x8x128xf32>
      %cst_17 = arith.constant dense<0.000000e+00> : vector<8x128xf32>
      %39 = vector.multi_reduction <add>, %38, %cst_17 [0] : vector<2x8x128xf32> to vector<8x128xf32>
      %40 = arith.addf %37, %39 : vector<8x128xf32>
      %c0_18 = arith.constant 0 : index
      %c0_19 = arith.constant 0 : index
      %41 = vector.load %arg4[%c0_18, %c0_19] : memref<8x128xf32, #tpu.memory_space<vmem>>, vector<8x128xf32>
      tpu.vector_store %arg4[%c0_18, %c0_19], %40 {strides = array<i32>} : memref<8x128xf32, #tpu.memory_space<vmem>>, vector<8x128xf32>,
    } else {
    }
    %35 = arith.extui %31 : i1 to i32
    %c0_i32_14 = arith.constant 0 : i32
    %36 = arith.cmpi ne, %35, %c0_i32_14 : i32
    scf.if %36 {
      %c16_i32_15 = arith.constant 16 : i32
      %37 = arith.muli %28, %c16_i32_15 : i32
      %38 = tpu.iota {dimensions = array<i32: 0>} : vector<16x128xi32>
      %39 = vector.broadcast %37 : i32 to vector<16x128xi32>
      %40 = arith.addi %39, %38 : vector<16x128xi32>
      %c16_i32_16 = arith.constant 16 : i32
      %41 = vector.broadcast %c16_i32_16 : i32 to vector<16x128xi32>
      %42 = arith.cmpi slt, %40, %41 : vector<16x128xi32>
      %cst_17 = arith.constant 0.000000e+00 : f32
      %43 = vector.broadcast %cst_17 : f32 to vector<16x128xf32>
      %44 = arith.select %42, %26, %43 : vector<16x128xi1>, vector<16x128xf32>
      %c0_18 = arith.constant 0 : index
      %c0_19 = arith.constant 0 : index
      %45 = vector.load %arg4[%c0_18, %c0_19] : memref<8x128xf32, #tpu.memory_space<vmem>>, vector<8x128xf32>
      %46 = vector.shape_cast %44 : vector<16x128xf32> to vector<2x8x128xf32>
      %cst_20 = arith.constant dense<0.000000e+00> : vector<8x128xf32>
      %47 = vector.multi_reduction <add>, %46, %cst_20 [0] : vector<2x8x128xf32> to vector<8x128xf32>
      %48 = arith.addf %45, %47 : vector<8x128xf32>
      %c0_21 = arith.constant 0 : index
      %c0_22 = arith.constant 0 : index
      %49 = vector.load %arg4[%c0_21, %c0_22] : memref<8x128xf32, #tpu.memory_space<vmem>>, vector<8x128xf32>
      tpu.vector_store %arg4[%c0_21, %c0_22], %48 {strides = array<i32>} : memref<8x128xf32, #tpu.memory_space<vmem>>, vector<8x128xf32>,
    } else {
    }
    return
  }
  func.func @transform_0(%arg0: i32, %arg1: i32) -> (i32, i32) {
    %c1_i32 = arith.constant 1 : i32
    %0 = arith.muli %arg0, %c1_i32 : i32
    %1 = arith.addi %0, %arg1 : i32
    %c0_i32 = arith.constant 0 : i32
    %2 = arith.minsi %1, %c0_i32 : i32
    %c0_i32_0 = arith.constant 0 : i32
    %c0_i32_1 = arith.constant 0 : i32
    return %2, %c0_i32_0 : i32, i32
  }
  func.func @transform_1(%arg0: i32, %arg1: i32) -> (i32, i32) {
    %c1_i32 = arith.constant 1 : i32
    %0 = arith.muli %arg0, %c1_i32 : i32
    %1 = arith.addi %0, %arg1 : i32
    %c0_i32 = arith.constant 0 : i32
    %2 = arith.minsi %1, %c0_i32 : i32
    %c0_i32_0 = arith.constant 0 : i32
    %c0_i32_1 = arith.constant 0 : i32
    return %2, %c0_i32_0 : i32, i32
  }
  func.func @transform_2(%arg0: i32, %arg1: i32) -> (i32, i32) {
    %c0_i32 = arith.constant 0 : i32
    %c0_i32_0 = arith.constant 0 : i32
    return %arg0, %c0_i32 : i32, i32
  }
}

</mosaic_0001>

<llo_original>
// kernel: tpu_custom_call.1
$region0: #{tpu_custom_call.1}
  #allocation0 [shape = 'u32[]', space=smem, size = 0x4, offset = 0x4, fixed_abs, tag = 'smem constant byte address 0x4 - core index']
  #allocation1 [shape = 'u32[144,128]{1,0:T(1,128)}', space=vmem, size = 0x12000, scoped, tag = 'internal scratch']
  %s0 = inlined_call_operand.hbm [shape: f32[16,128], index: 0, kind: input, shape index: {}]
  %s1 = inlined_call_operand.hbm [shape: f32[16,128], index: 1, kind: input, shape index: {}]
  %s2 = inlined_call_operand.hbm [shape: f32[8,128], index: 2, kind: output, shape index: {}]
  %s3 = sld [smem:[#allocation0]]
  $region38: #{tpu_custom_call.1} parent=0
    _
  %s5 = ssub.s32 1, %s3
  %s6 = scalar_select 0, %s5, %s3
  $region1: #{tpu_custom_call.1} parent=0
    #allocation2 [shape = 'u8[8192]{0}', space=vmem, size = 0x2000, scoped, tag = 'input window, operand 0, single buffered']
    #allocation3 [shape = 's32[1]{0}', space=sflag, size = 0x4, scoped, tag = 'scoped memory for tpu_custom_call.1']
    #allocation4 [shape = 's32[1]{0}', space=sflag, size = 0x4, scoped, tag = 'scoped memory for tpu_custom_call.1']
    #allocation5 [shape = 'u8[8192]{0}', space=vmem, size = 0x2000, scoped, tag = 'input window, operand 1, single buffered']
    #allocation6 [shape = 's32[1]{0}', space=sflag, size = 0x4, scoped, tag = 'scoped memory for tpu_custom_call.1']
    #allocation7 [shape = 'u8[4096]{0}', space=vmem, size = 0x1000, scoped, tag = 'output window, operand 0, single buffered']
    %7 = vsyncpa [#allocation3], 0
    %8 = vsyncpa [#allocation6], 0
    %9 = vsyncpa [#allocation4], 0
    // Predicated region
    $region2: #{tpu_custom_call.1} parent=1 // pred_check
      _
    $region3: #{tpu_custom_call.1} parent=1 // pred_check_branch
      %11 = sbr.rel (0) target = $region5
    $region4: #{tpu_custom_call.1} parent=1 // pred_region
      %s12 = sadd.s32 0, 0
      %p13 = scmp.lt.s32.totalorder %s12, 0
      %s14 = scalar_select %p13, %s12, 0
      %s15 = smul.u32 2, %s14
      %s17 = ssub.s32 256, 256
      %18 = vsyncadd [#allocation3], %s17
      %s19 = smul.addr %s15, 128
      %s20 = scalar_lea.hbm %s0, %s19
      %s21 = sshll.u32 [#allocation2], 4
      %s22 = int_to_ptr.vmem [resolvable:$true] %s21
      %27 = dma.hbm_to_vmem [thread:$0]  %s20, 256, %s22, [#allocation3], 128, 128, 8
    $region5: #{tpu_custom_call.1} parent=1 // pred_fallthru
      _
    // Predicated region
    $region6: #{tpu_custom_call.1} parent=1 // pred_check
      _
    $region7: #{tpu_custom_call.1} parent=1 // pred_check_branch
      %29 = sbr.rel (0) target = $region9
    $region8: #{tpu_custom_call.1} parent=1 // pred_region
      %s30 = sadd.s32 0, 0
      %p31 = scmp.lt.s32.totalorder %s30, 0
      %s32 = scalar_select %p31, %s30, 0
      %s33 = smul.u32 2, %s32
      %s35 = ssub.s32 256, 256
      %36 = vsyncadd [#allocation6], %s35
      %s37 = smul.addr %s33, 128
      %s38 = scalar_lea.hbm %s1, %s37
      %s39 = sshll.u32 [#allocation5], 4
      %s40 = int_to_ptr.vmem [resolvable:$true] %s39
      %45 = dma.hbm_to_vmem [thread:$0]  %s38, 256, %s40, [#allocation6], 128, 128, 8
    $region9: #{tpu_custom_call.1} parent=1 // pred_fallthru
      _
    // Predicated region
    $region10: #{tpu_custom_call.1} parent=1 // pred_check
      _
    $region11: #{tpu_custom_call.1} parent=1 // pred_check_branch
      %47 = sbr.rel (0) target = $region13
    $region12: #{tpu_custom_call.1} parent=1 // pred_region
      %48 = dma.done [#allocation3], 256
    $region13: #{tpu_custom_call.1} parent=1 // pred_fallthru
      _
    // Predicated region
    $region14: #{tpu_custom_call.1} parent=1 // pred_check
      _
    $region15: #{tpu_custom_call.1} parent=1 // pred_check_branch
      %50 = sbr.rel (0) target = $region17
    $region16: #{tpu_custom_call.1} parent=1 // pred_region
      %51 = dma.done [#allocation6], 256
    $region17: #{tpu_custom_call.1} parent=1 // pred_fallthru
      _
    %s52 = sadd.s32 0, 0
    %p53 = scmp.lt.s32.totalorder %s52, 0
    %s54 = scalar_select %p53, %s52, 0
    %s55 = smul.u32 2, %s54
    %s56 = sadd.s32 0, 0
    %p57 = scmp.lt.s32.totalorder %s56, 0
    %s58 = scalar_select %p57, %s56, 0
    %s59 = smul.u32 2, %s58
    %p60 = scmp.eq.s32.totalorder 0, 0
    // Predicated region
    $region18: #{tpu_custom_call.1} parent=1 // pred_check
      %p61 = pneg %p60
    $region19: #{tpu_custom_call.1} parent=1 // pred_check_branch
      %63 = sbr.rel (%p61) target = $region21
    $region20: #{tpu_custom_call.1} parent=1 // pred_region
      %64 = vst [vmem:[#allocation7] sm:$0xff] 0.0
    $region21: #{tpu_custom_call.1} parent=1 // pred_fallthru
      _
    %v65 = vld [vmem:[#allocation2] sm:$0xff]
    %v66 = vld [vmem:[#allocation2 + $0x8] sm:$0xff]
    %v67 = vld [vmem:[#allocation5] sm:$0xff]
    %v68 = vld [vmem:[#allocation5 + $0x8] sm:$0xff]
    %vm69 = vcmp.ne.f32.partialorder %v65, 0.0
    %vm70 = vcmp.ne.f32.partialorder %v66, 0.0
    %vm71 = vcmp.ne.f32.partialorder %v65, -1000.0
    %vm72 = vcmp.ne.f32.partialorder %v66, -1000.0
    %vm73 = vmand %vm69, %vm71
    %vm74 = vmand %vm70, %vm72
    %vm75 = vcmp.ne.f32.partialorder %v67, 0.0
    %vm76 = vcmp.ne.f32.partialorder %v68, 0.0
    %vm77 = vcmp.ne.f32.partialorder %v67, -1000.0
    %vm78 = vcmp.ne.f32.partialorder %v68, -1000.0
    %vm79 = vmand %vm75, %vm77
    %vm80 = vmand %vm76, %vm78
    %v81 = vsel %vm73, %v65, 1.0
    %v82 = vsel %vm74, %v66, 1.0
    %v83 = vsel %vm79, %v67, 1.0
    %v84 = vsel %vm80, %v68, 1.0
    %v85 = vsel %vm73, %v83, 0.0
    %v86 = vsel %vm74, %v84, 0.0
    %v87 = vsel %vm79, %v81, 0.0
    %v88 = vsel %vm80, %v82, 0.0
    %v89 = vsub.f32 %v85, %v87
    %v90 = vsub.f32 %v86, %v88
    %v91 = vmul.f32 %v81, %v83
    %v92 = vmul.f32 %v82, %v84
    %v93 = vrcp.pop %v91
    %v94 = vmul.f32 %v89, %v93
    %v95 = vrcp.pop %v92
    %v96 = vmul.f32 %v90, %v95
    %v97 = vmul.f32 %v94, %v94
    %v98 = vmul.f32 %v96, %v96
    %s99 = sadd.s32 0, 0
    %s100 = sadd.s32 %s99, 1
    %s101 = smul.u32 %s100, 16
    %p102 = scmp.gt.s32.totalorder %s101, 16
    %p103 = scmp.le.s32.totalorder %s101, 16
    // Predicated region
    $region22: #{tpu_custom_call.1} parent=1 // pred_check
      %p104 = pneg %p103
    $region23: #{tpu_custom_call.1} parent=1 // pred_check_branch
      %106 = sbr.rel (%p104) target = $region25
    $region24: #{tpu_custom_call.1} parent=1 // pred_region
      %v107 = vld [vmem:[#allocation7] sm:$0xff]
      %v108 = vadd.f32 %v97, %v98
      %v109 = vadd.f32 %v107, %v108
      %110 = vst [vmem:[#allocation7] sm:$0xff] %v109
    $region25: #{tpu_custom_call.1} parent=1 // pred_fallthru
      _
    // Predicated region
    $region26: #{tpu_custom_call.1} parent=1 // pred_check
      %p111 = pneg %p102
    $region27: #{tpu_custom_call.1} parent=1 // pred_check_branch
      %113 = sbr.rel (%p111) target = $region29
    $region28: #{tpu_custom_call.1} parent=1 // pred_region
      %s114 = smul.u32 %s99, 16
      %v115 = vlaneseq
      %v116 = vshrl.u32 %v115, 7
      %v117 = vadd.s32 %v116, 8
      %v118 = vstv %s114
      %v119 = vadd.s32 %v118, %v116
      %v120 = vadd.s32 %v118, %v117
      %vm121 = vcmp.lt.s32.totalorder %v119, 16
      %vm122 = vcmp.lt.s32.totalorder %v120, 16
      %v123 = vsel %vm121, %v97, 0.0
      %v124 = vsel %vm122, %v98, 0.0
      %v125 = vld [vmem:[#allocation7] sm:$0xff]
      %v126 = vadd.f32 %v123, %v124
      %v127 = vadd.f32 %v125, %v126
      %128 = vst [vmem:[#allocation7] sm:$0xff] %v127
    $region29: #{tpu_custom_call.1} parent=1 // pred_fallthru
      _
    // Predicated region
    $region30: #{tpu_custom_call.1} parent=1 // pred_check
      _
    $region31: #{tpu_custom_call.1} parent=1 // pred_check_branch
      %130 = sbr.rel (0) target = $region33
    $region32: #{tpu_custom_call.1} parent=1 // pred_region
      %s132 = ssub.s32 128, 128
      %133 = vsyncadd [#allocation4], %s132
      %s135 = sshll.u32 [#allocation7], 4
      %s136 = int_to_ptr.vmem [resolvable:$true] %s135
      %138 = dma.vmem_to_hbm [thread:$0]  %s136, 128, %s2, [#allocation4]
    $region33: #{tpu_custom_call.1} parent=1 // pred_fallthru
      _
    // Predicated region
    $region34: #{tpu_custom_call.1} parent=1 // pred_check
      _
    $region35: #{tpu_custom_call.1} parent=1 // pred_check_branch
      %140 = sbr.rel (0) target = $region37
    $region36: #{tpu_custom_call.1} parent=1 // pred_region
      %141 = dma.done [#allocation4], 128
    $region37: #{tpu_custom_call.1} parent=1 // pred_fallthru
      _
    %142 = vsyncpa [#allocation3], 1
    %143 = vsyncpa [#allocation6], 1
    %144 = vsyncpa [#allocation4], 1

</llo_original>
